<compile_context>
chip_gen: v6e
topology: v6e:2x2x1
jax: 0.10.0
libtpu: 0.0.40
codegen_flags: <defaults>
</compile_context>

<pallas_src>
import functools

import jax
import jax.numpy as jnp
from jax.experimental import pallas as pl
from jax.experimental.pallas import tpu as pltpu

_MIB = 1024 * 1024


def _vmem_budgets():
    """(block_bytes_target, vmem_limit_bytes), generation-aware."""
    try:
        cap = int(pltpu.get_tpu_info().vmem_capacity_bytes)
    except Exception:
        cap = 64 * _MIB
    if cap >= 100 * _MIB:            # v5e / v6e: 128 MiB VMEM per TensorCore
        return 8 * _MIB, 80 * _MIB
    return 4 * _MIB, 48 * _MIB       # v7x (64 MiB per TC) or unknown


def _pick_lane_tile(hw, max_lanes):
    """Largest divisor of hw that is a multiple of 128 and <= max_lanes, else hw."""
    if hw <= max_lanes:
        return hw
    cap = max(128, max_lanes - max_lanes % 128)
    for t in range(cap, 0, -128):
        if hw % t == 0:
            return t
    # TODO(synk): HW with no 128-multiple divisor falls back to the full
    # (masked-lane / possibly oversized) block instead of masked-tail tiling.
    return hw


def _pick_batch_tile(b, c, hwt, itemsize, block_bytes):
    """Largest divisor of b with bt*c*hwt*itemsize <= block_bytes (>= 1)."""
    max_bt = max(1, block_bytes // max(1, c * hwt * itemsize))
    for bt in range(min(b, max_bt), 0, -1):
        if b % bt == 0:
            return bt
    return 1


# ----------------------------------------------------------------------------
# Kernels
# ----------------------------------------------------------------------------
def _fused_bn_kernel(x_ref, gamma_ref, beta_ref, o_ref, *, eps, inv_n):
    """One-pass BN when a whole group is resident in VMEM.

    Blocks: x_ref/o_ref (1, B, C, HW); gamma_ref/beta_ref (1, C, 1).
    """
    xf = x_ref[...].astype(jnp.float32)
    s = jnp.sum(xf, axis=(1, 3), keepdims=True)            # (1, 1, C, 1)
    ss = jnp.sum(xf * xf, axis=(1, 3), keepdims=True)
    mean = s * inv_n
    var = jnp.maximum(ss * inv_n - mean * mean, 0.0)        # biased, clamped
    inv = jax.lax.rsqrt(var + eps)
    scale = gamma_ref[...][:, None, :, :] * inv             # (1, 1, C, 1)
    shift = beta_ref[...][:, None, :, :] - mean * scale
    o_ref[...] = (xf * scale + shift).astype(o_ref.dtype)


def _stats_kernel(x_ref, stat_ref, part_ref, *, lw):
    """Accumulate per-channel (sum, sum(x^2)) for one (group, chunk).

    Block views at grid step (gc, t):
      x_ref:    (1, bt, C, hwt)  -- C on sublanes, HW on lanes
      stat_ref: (1, 2, C)        -- resident output, written only at last step
      part_ref: (2, C, lw)       -- VMEM scratch, lane-parallel partial sums
    """
    t = pl.program_id(1)
    nt = pl.num_programs(1)

    @pl.when(t == 0)
    def _init():
        part_ref[...] = jnp.zeros_like(part_ref)

    xf = x_ref[0].astype(jnp.float32)                       # (bt, C, hwt)
    sq = xf * xf
    # VPU-only per-tile work: reduce batch rows, then fold 128-wide lane
    # groups with static tile-aligned slices. The expensive cross-lane XLU
    # reduce + sublane->lane relayout happens once per chunk (in _flush).
    s = jnp.sum(xf, axis=0)                                 # (C, hwt)
    q = jnp.sum(sq, axis=0)
    hwt = s.shape[-1]
    acc_s = s[:, 0:lw]
    acc_q = q[:, 0:lw]
    for k in range(1, hwt // lw):
        acc_s = acc_s + s[:, k * lw:(k + 1) * lw]
        acc_q = acc_q + q[:, k * lw:(k + 1) * lw]
    part_ref[0] += acc_s
    part_ref[1] += acc_q

    @pl.when(t == nt - 1)
    def _flush():
        stat_ref[0] = jnp.sum(part_ref[...], axis=-1)       # (2, C)


def _normalize_kernel(x_ref, scale_ref, shift_ref, o_ref):
    """y = x * scale + shift (BN + affine folded; 2 VALU ops per element)."""
    # scale/shift blocks are (1, C, 1): C already on sublanes, so this is a
    # pure broadcast along lanes -- no in-kernel relayout.
    scale = scale_ref[...][:, None, :, :]                   # (1, 1, C, 1)
    shift = shift_ref[...][:, None, :, :]
    o_ref[...] = (x_ref[...].astype(jnp.float32) * scale
                  + shift).astype(o_ref.dtype)


# ----------------------------------------------------------------------------
# Wrapper
# ----------------------------------------------------------------------------
def triple_bn(x_nchw, gamma, beta, eps=1e-5, *,
              _block_bytes=None, _force_two_pass=False):
    """Forward of Triple_BN: three independent training-mode BatchNorm2d.

    x_nchw: (3*B, C, H, W);  gamma, beta: (3, C) -- one pair per BN branch.
    """
    N, C, H, W = x_nchw.shape
    assert N % 3 == 0, "Triple_BN expects batch divisible by 3"
    B = N // 3
    HW = H * W
    inv_n = 1.0 / float(B * HW)
    eps = float(eps)

    itemsize = jnp.dtype(x_nchw.dtype).itemsize
    total = 3 * B * C * HW

    block_target, vmem_limit = _vmem_budgets()
    if _block_bytes is not None:
        block_target = int(_block_bytes)

    # Free reshapes only (no transposes): NCHW -> (3, B, C, H*W).
    x = x_nchw.reshape(3, B, C, HW)
    g3 = gamma.reshape(3, C).astype(jnp.float32)
    b3 = beta.reshape(3, C).astype(jnp.float32)

    # ---- Fast path: fused single pass when a group fits in one block -------
    group_bytes = B * C * HW * itemsize
    group_f32_bytes = B * C * HW * 4
    if not _force_two_pass and group_f32_bytes <= block_target:
        fused_limit = max(vmem_limit,
                          4 * group_bytes + group_f32_bytes + 4 * _MIB)
        out = pl.pallas_call(
            functools.partial(_fused_bn_kernel, eps=eps, inv_n=inv_n),
            out_shape=jax.ShapeDtypeStruct((3, B, C, HW), x.dtype),
            grid_spec=pltpu.PrefetchScalarGridSpec(
                num_scalar_prefetch=0,
                grid=(3,),
                in_specs=[
                    pl.BlockSpec((1, B, C, HW), lambda g: (g, 0, 0, 0)),
                    pl.BlockSpec((1, C, 1), lambda g: (g, 0, 0)),
                    pl.BlockSpec((1, C, 1), lambda g: (g, 0, 0)),
                ],
                out_specs=pl.BlockSpec((1, B, C, HW), lambda g: (g, 0, 0, 0)),
            ),
            compiler_params=pltpu.CompilerParams(
                dimension_semantics=("parallel",),
                vmem_limit_bytes=fused_limit,
            ),
            cost_estimate=pl.CostEstimate(
                flops=5 * total, transcendentals=3 * C,
                bytes_accessed=2 * total * itemsize),
        )(x, g3.reshape(3, C, 1), b3.reshape(3, C, 1))
        return out.reshape(3 * B, C, H, W)

    # ---- Two-pass streaming path --------------------------------------------
    max_lanes = max(128, block_target // max(1, C * itemsize))
    hwt = _pick_lane_tile(HW, max_lanes)
    bt = _pick_batch_tile(B, C, hwt, itemsize, block_target)
    n_b = B // bt
    n_hw = HW // hwt
    blk_bytes = bt * C * hwt * itemsize

    # Chunk the linearized row-tile sequence so the stats pass exposes a
    # leading "parallel" axis of 3*n_chunks (even => perfect 2-TensorCore
    # balance on v7x instead of a 2:1 split over the 3 groups).
    total_tiles = n_b * n_hw
    if total_tiles % 2 == 0:
        n_chunks = 2
    elif total_tiles % 3 == 0 and total_tiles > 1:
        n_chunks = 3
    else:
        n_chunks = 1
    tiles_per_chunk = total_tiles // n_chunks

    # Lane width of the scratch partial accumulator.
    lw = 128 if (hwt >= 128 and hwt % 128 == 0) else hwt

    # Guard: if an oversized fallback block was forced (HW with no usable
    # 128-multiple divisor), raise the scoped-VMEM limit to cover it.
    vmem_limit = max(vmem_limit, 4 * blk_bytes + 4 * _MIB)

    stats_in_kwargs = {}
    if blk_bytes <= 2 * _MIB and tiles_per_chunk >= 3:
        # Small tiles -> per-step DMA is short; deeper input buffering hides
        # inter-tile latency bubbles of this HBM-read-bound pass.
        stats_in_kwargs["pipeline_mode"] = pl.Buffered(3)

    def _x_stats_map(gc, t, _nc=n_chunks, _tpc=tiles_per_chunk, _nh=n_hw):
        g = gc // _nc
        idx = (gc % _nc) * _tpc + t
        return (g, idx // _nh, 0, idx % _nh)

    # ---- Pass 1: per-(group, chunk) raw per-channel (sum, sumsq) ------------
    stats = pl.pallas_call(
        functools.partial(_stats_kernel, lw=lw),
        out_shape=jax.ShapeDtypeStruct((3 * n_chunks, 2, C), jnp.float32),
        grid_spec=pltpu.PrefetchScalarGridSpec(
            num_scalar_prefetch=0,
            grid=(3 * n_chunks, tiles_per_chunk),
            in_specs=[
                pl.BlockSpec((1, bt, C, hwt), _x_stats_map, **stats_in_kwargs),
            ],
            out_specs=pl.BlockSpec((1, 2, C), lambda gc, t: (gc, 0, 0)),
            scratch_shapes=[pltpu.VMEM((2, C, lw), jnp.float32)],
        ),
        compiler_params=pltpu.CompilerParams(
            dimension_semantics=("parallel", "arbitrary"),
            vmem_limit_bytes=vmem_limit,
        ),
        cost_estimate=pl.CostEstimate(
            flops=3 * total, transcendentals=0,
            bytes_accessed=total * itemsize + 3 * n_chunks * 2 * C * 4),
    )(x)

    # Tiny (3*n_chunks*2*C floats) combine + BN fold done by XLA: merge chunk
    # partials, biased variance (clamped), fold eps/rsqrt/gamma/beta into a
    # single per-channel (scale, shift).
    sums = stats.reshape(3, n_chunks, 2, C).sum(axis=1)     # (3, 2, C)
    mean = sums[:, 0, :] * inv_n                            # (3, C)
    var = jnp.maximum(sums[:, 1, :] * inv_n - mean * mean, 0.0)
    scale = g3 * jax.lax.rsqrt(var + eps)                   # (3, C)
    shift = b3 - mean * scale
    scale = scale.reshape(3, C, 1)
    shift = shift.reshape(3, C, 1)

    # ---- Pass 2: lane-dense streaming normalize ------------------------------
    # TODO(synk): if the caller donates x, add input_output_aliases={0: 0}
    # here to reuse x's HBM buffer for the output (halves peak HBM footprint).
    out = pl.pallas_call(
        _normalize_kernel,
        out_shape=jax.ShapeDtypeStruct((3, B, C, HW), x.dtype),
        grid_spec=pltpu.PrefetchScalarGridSpec(
            num_scalar_prefetch=0,
            grid=(3, n_b, n_hw),
            in_specs=[
                pl.BlockSpec((1, bt, C, hwt),
                             lambda g, bi, hi: (g, bi, 0, hi)),
                pl.BlockSpec((1, C, 1), lambda g, bi, hi: (g, 0, 0)),
                pl.BlockSpec((1, C, 1), lambda g, bi, hi: (g, 0, 0)),
            ],
            out_specs=pl.BlockSpec((1, bt, C, hwt),
                                   lambda g, bi, hi: (g, bi, 0, hi)),
        ),
        compiler_params=pltpu.CompilerParams(
            dimension_semantics=("parallel", "parallel", "parallel"),
            vmem_limit_bytes=vmem_limit,
        ),
        cost_estimate=pl.CostEstimate(
            flops=2 * total, transcendentals=0,
            bytes_accessed=2 * total * itemsize + 3 * C * 8),
    )(x, scale, shift)

    return out.reshape(3 * B, C, H, W)


def _reference_triple_bn(x_nchw, gamma, beta, eps=1e-5):
    """Plain-JAX reference (training-mode BN) for correctness checking."""
    N, C, H, W = x_nchw.shape
    B = N // 3
    outs = []
    for i in range(3):
        xi = x_nchw[i * B:(i + 1) * B].astype(jnp.float32)
        mean = jnp.mean(xi, axis=(0, 2, 3), keepdims=True)
        var = jnp.mean((xi - mean) ** 2, axis=(0, 2, 3), keepdims=True)
        yi = (xi - mean) / jnp.sqrt(var + eps)
        yi = yi * gamma[i].reshape(1, C, 1, 1) + beta[i].reshape(1, C, 1, 1)
        outs.append(yi)
    return jnp.concatenate(outs, axis=0).astype(x_nchw.dtype)


if __name__ == "__main__":
    key = jax.random.PRNGKey(0)
    kx, kg, kb, kx2 = jax.random.split(key, 4)

    # --- Test 1: small shape, default dispatch (fused single-pass path) -----
    B, C, H, W = 2, 4, 16, 16
    x = jax.random.normal(kx, (3 * B, C, H, W), dtype=jnp.float32)
    gamma = 1.0 + 0.1 * jax.random.normal(kg, (3, C), dtype=jnp.float32)
    beta = 0.1 * jax.random.normal(kb, (3, C), dtype=jnp.float32)

    out = jax.block_until_ready(triple_bn(x, gamma, beta, eps=1e-5))
    ref = _reference_triple_bn(x, gamma, beta, eps=1e-5)
    assert out.shape == (3 * B, C, H, W)
    assert jnp.allclose(out, ref, atol=1e-4, rtol=1e-4)

    # --- Test 2: same data, forced two-pass path with tiny blocks so the
    #     tiled / chunked stats accumulator and normalize pass are exercised --
    out2 = jax.block_until_ready(
        triple_bn(x, gamma, beta, eps=1e-5,
                  _force_two_pass=True, _block_bytes=2 * 1024))
    assert jnp.allclose(out2, ref, atol=1e-4, rtol=1e-4)

    # --- Test 3: bf16 input, forced two-pass, multiple 128-lane groups -------
    B3, C3, H3, W3 = 2, 8, 32, 32
    kg3, kb3 = jax.random.split(kg, 2)
    x3 = jax.random.normal(kx2, (3 * B3, C3, H3, W3),
                           dtype=jnp.float32).astype(jnp.bfloat16)
    gamma3 = 1.0 + 0.1 * jax.random.normal(kg3, (3, C3), dtype=jnp.float32)
    beta3 = 0.1 * jax.random.normal(kb3, (3, C3), dtype=jnp.float32)
    out3 = jax.block_until_ready(
        triple_bn(x3, gamma3, beta3, eps=1e-5,
                  _force_two_pass=True, _block_bytes=8 * 1024))
    ref3 = _reference_triple_bn(x3, gamma3, beta3, eps=1e-5)
    assert jnp.allclose(out3.astype(jnp.float32), ref3.astype(jnp.float32),
                        atol=8e-2, rtol=8e-2)

    print("KERNEL_OK")
</pallas_src>

<mosaic_0001>
module attributes {stable_mosaic.version = 11 : i64} {
  func.func @_fused_bn_kernel(%arg0: i32, %arg1: memref<1x2x4x256xf32, #tpu.memory_space<vmem>>, %arg2: memref<1x4x1xf32, #tpu.memory_space<vmem>>, %arg3: memref<1x4x1xf32, #tpu.memory_space<vmem>>, %arg4: memref<1x2x4x256xf32, #tpu.memory_space<vmem>>) attributes {dimension_semantics = [#tpu.dimension_semantics<parallel>], iteration_bounds = array<i64: 3>, scalar_prefetch = 0 : i64, scratch_operands = 0 : i64, tpu.core_type = #tpu.core_type<tc>, window_params = [{transform_indices = @transform_0, window_bounds = array<i64: 1, 2, 4, 256>}, {transform_indices = @transform_1, window_bounds = array<i64: 1, 4, 1>}, {transform_indices = @transform_2, window_bounds = array<i64: 1, 4, 1>}, {transform_indices = @transform_3, window_bounds = array<i64: 1, 2, 4, 256>}]} {
    %c0 = arith.constant 0 : index
    %c0_0 = arith.constant 0 : index
    %c0_1 = arith.constant 0 : index
    %c0_2 = arith.constant 0 : index
    %0 = vector.load %arg1[%c0, %c0_0, %c0_1, %c0_2] : memref<1x2x4x256xf32, #tpu.memory_space<vmem>>, vector<1x2x4x256xf32>
    %cst = arith.constant dense<0.000000e+00> : vector<1x4xf32>
    %1 = vector.multi_reduction <add>, %0, %cst [1, 3] : vector<1x2x4x256xf32> to vector<1x4xf32>
    %2 = vector.shape_cast %1 : vector<1x4xf32> to vector<1x1x4x1xf32>
    %3 = arith.mulf %0, %0 : vector<1x2x4x256xf32>
    %cst_3 = arith.constant dense<0.000000e+00> : vector<1x4xf32>
    %4 = vector.multi_reduction <add>, %3, %cst_3 [1, 3] : vector<1x2x4x256xf32> to vector<1x4xf32>
    %5 = vector.shape_cast %4 : vector<1x4xf32> to vector<1x1x4x1xf32>
    %cst_4 = arith.constant 0.001953125 : f32
    %6 = vector.broadcast %cst_4 : f32 to vector<1x1x4x1xf32>
    %7 = arith.mulf %2, %6 : vector<1x1x4x1xf32>
    %cst_5 = arith.constant 0.001953125 : f32
    %8 = vector.broadcast %cst_5 : f32 to vector<1x1x4x1xf32>
    %9 = arith.mulf %5, %8 : vector<1x1x4x1xf32>
    %10 = arith.mulf %7, %7 : vector<1x1x4x1xf32>
    %11 = arith.subf %9, %10 : vector<1x1x4x1xf32>
    %cst_6 = arith.constant 0.000000e+00 : f32
    %12 = vector.broadcast %cst_6 : f32 to vector<1x1x4x1xf32>
    %13 = arith.maximumf %11, %12 : vector<1x1x4x1xf32>
    %cst_7 = arith.constant 9.99999974E-6 : f32
    %14 = vector.broadcast %cst_7 : f32 to vector<1x1x4x1xf32>
    %15 = arith.addf %13, %14 : vector<1x1x4x1xf32>
    %16 = math.rsqrt %15 : vector<1x1x4x1xf32>
    %c0_8 = arith.constant 0 : index
    %c0_9 = arith.constant 0 : index
    %c0_10 = arith.constant 0 : index
    %17 = vector.load %arg2[%c0_8, %c0_9, %c0_10] : memref<1x4x1xf32, #tpu.memory_space<vmem>>, vector<1x4x1xf32>
    %18 = vector.shape_cast %17 : vector<1x4x1xf32> to vector<1x1x4x1xf32>
    %19 = arith.mulf %18, %16 : vector<1x1x4x1xf32>
    %c0_11 = arith.constant 0 : index
    %c0_12 = arith.constant 0 : index
    %c0_13 = arith.constant 0 : index
    %20 = vector.load %arg3[%c0_11, %c0_12, %c0_13] : memref<1x4x1xf32, #tpu.memory_space<vmem>>, vector<1x4x1xf32>
    %21 = vector.shape_cast %20 : vector<1x4x1xf32> to vector<1x1x4x1xf32>
    %22 = arith.mulf %7, %19 : vector<1x1x4x1xf32>
    %23 = arith.subf %21, %22 : vector<1x1x4x1xf32>
    %24 = vector.broadcast %19 : vector<1x1x4x1xf32> to vector<1x2x4x256xf32>
    %25 = arith.mulf %0, %24 : vector<1x2x4x256xf32>
    %26 = vector.broadcast %23 : vector<1x1x4x1xf32> to vector<1x2x4x256xf32>
    %27 = arith.addf %25, %26 : vector<1x2x4x256xf32>
    %c0_14 = arith.constant 0 : index
    %c0_15 = arith.constant 0 : index
    %c0_16 = arith.constant 0 : index
    %c0_17 = arith.constant 0 : index
    %28 = vector.load %arg4[%c0_14, %c0_15, %c0_16, %c0_17] : memref<1x2x4x256xf32, #tpu.memory_space<vmem>>, vector<1x2x4x256xf32>
    tpu.vector_store %arg4[%c0_14, %c0_15, %c0_16, %c0_17], %27 {strides = array<i32>} : memref<1x2x4x256xf32, #tpu.memory_space<vmem>>, vector<1x2x4x256xf32>,
    return
  }
  func.func @transform_0(%arg0: i32) -> (i32, i32, i32, i32) {
    %c0_i32 = arith.constant 0 : i32
    %c0_i32_0 = arith.constant 0 : i32
    %c0_i32_1 = arith.constant 0 : i32
    %c0_i32_2 = arith.constant 0 : i32
    return %arg0, %c0_i32, %c0_i32_0, %c0_i32_1 : i32, i32, i32, i32
  }
  func.func @transform_1(%arg0: i32) -> (i32, i32, i32) {
    %c0_i32 = arith.constant 0 : i32
    %c0_i32_0 = arith.constant 0 : i32
    %c0_i32_1 = arith.constant 0 : i32
    return %arg0, %c0_i32, %c0_i32_0 : i32, i32, i32
  }
  func.func @transform_2(%arg0: i32) -> (i32, i32, i32) {
    %c0_i32 = arith.constant 0 : i32
    %c0_i32_0 = arith.constant 0 : i32
    %c0_i32_1 = arith.constant 0 : i32
    return %arg0, %c0_i32, %c0_i32_0 : i32, i32, i32
  }
  func.func @transform_3(%arg0: i32) -> (i32, i32, i32, i32) {
    %c0_i32 = arith.constant 0 : i32
    %c0_i32_0 = arith.constant 0 : i32
    %c0_i32_1 = arith.constant 0 : i32
    %c0_i32_2 = arith.constant 0 : i32
    return %arg0, %c0_i32, %c0_i32_0, %c0_i32_1 : i32, i32, i32, i32
  }
}

</mosaic_0001>

<llo_original>
// kernel: tpu_custom_call.1
$region0: #{tpu_custom_call.1}
  #allocation0 [shape = 'u32[]', space=smem, size = 0x4, offset = 0x4, fixed_abs, tag = 'smem constant byte address 0x4 - core index']
  #allocation1 [shape = 'u32[144,128]{1,0:T(1,128)}', space=vmem, size = 0x12000, scoped, tag = 'internal scratch']
  %s0 = inlined_call_operand.hbm [shape: f32[3,2,4,256], index: 0, kind: input, shape index: {}]
  %s1 = inlined_call_operand.vmem [shape: f32[3,4,1], index: 1, kind: input, shape index: {}]
  %s2 = inlined_call_operand.vmem [shape: f32[3,4,1], index: 2, kind: input, shape index: {}]
  %s3 = inlined_call_operand.hbm [shape: f32[3,2,4,256], index: 3, kind: output, shape index: {}]
  %s4 = sld [smem:[#allocation0]]
  $region49: #{tpu_custom_call.1} parent=0
    _
  %s6 = ssub.s32 1, %s4
  %s7 = scalar_select 0, %s6, %s4
  $region1: #{tpu_custom_call.1} parent=0
    #allocation2 [shape = 'u8[16384]{0}', space=vmem, size = 0x4000, scoped, tag = 'input window, operand 0']
    #allocation3 [shape = 's32[2]{0}', space=sflag, size = 0x8, scoped, tag = 'scoped memory for tpu_custom_call.1']
    #allocation4 [shape = 's32[2]{0}', space=sflag, size = 0x8, scoped, tag = 'scoped memory for tpu_custom_call.1']
    #allocation5 [shape = 'u8[16384]{0}', space=vmem, size = 0x4000, scoped, tag = 'output window, operand 0']
    %8 = vsyncpa [#allocation3], 0
    %s9 = scalar_lea.sflag [#allocation3], 1
    %10 = vsyncpa %s9, 0
    %11 = vsyncpa [#allocation4], 0
    %s12 = scalar_lea.sflag [#allocation4], 1
    %13 = vsyncpa %s12, 0
    loop: start=0, step=1, limit=5
    $region2: #{tpu_custom_call.1} parent=1 // loop_pre_header
      _
    $region3: #{tpu_custom_call.1} parent=1 // loop_header
      %s15 = sphi 0, %s19
      %p16 = scmp.ge.s32.totalorder %s15, 5
      %s25 = sphi 0, %s27
      %s28 = sphi 0, %s25
      %s29 = sphi 0, %s28
      %s45 = sphi 0, %s29
      %s51 = sphi 0, %s53
      %s54 = sphi 0, %s51
      %s55 = sphi 0, %s54
      %s71 = sphi 0, %s55
      %s77 = sphi 0, %s79
      %s80 = sphi 0, %s77
      %s81 = sphi 0, %s80
      %s97 = sphi 0, %s81
      %s103 = sphi 0, %s105
      %s106 = sphi 0, %s103
      %s107 = sphi 0, %s106
      %s123 = sphi 0, %s107
    $region4: #{tpu_custom_call.1} parent=1 // loop_header_branch
      %18 = sbr.rel (%p16) target = $region8
    $region5: #{tpu_custom_call.1} parent=1 // loop_body
      %s20 = ssub.s32 %s15, 1
      %s21 = ssub.s32 %s15, 2
      %s22 = sadd.s32 %s15, 1
      %s23 = ssub.s32 %s15, %s22
      %p24 = scmp.eq.s32.totalorder %s23, 0
      %s26 = sadd.s32 %s25, 1
      %s27 = scalar_select %p24, %s25, %s26
      %p30 = pneg %p24
      %p31 = scmp.eq.s32.totalorder %s15, 2
      %p32 = por %p30, %p31
      %p33 = scmp.ne.s32.totalorder %s25, %s28
      %p34 = scmp.eq.s32.totalorder %s15, 0
      %p35 = por %p33, %p34
      %p36 = scmp.ne.s32.totalorder %s25, %s28
      %p37 = scmp.eq.s32.totalorder %s20, 2
      %p38 = por %p36, %p37
      %p39 = scmp.ne.s32.totalorder %s28, %s29
      %p40 = scmp.eq.s32.totalorder %s20, 0
      %p41 = por %p39, %p40
      %p42 = scmp.ne.s32.totalorder %s28, %s29
      %p43 = scmp.eq.s32.totalorder %s21, 2
      %p44 = por %p42, %p43
      %p46 = scmp.ne.s32.totalorder %s29, %s45
      %p47 = scmp.eq.s32.totalorder %s21, 0
      %p48 = por %p46, %p47
      %s49 = ssub.s32 %s15, %s22
      %p50 = scmp.eq.s32.totalorder %s49, 0
      %s52 = sadd.s32 %s51, 1
      %s53 = scalar_select %p50, %s51, %s52
      %p56 = pneg %p50
      %p57 = scmp.eq.s32.totalorder %s15, 2
      %p58 = por %p56, %p57
      %p59 = scmp.ne.s32.totalorder %s51, %s54
      %p60 = scmp.eq.s32.totalorder %s15, 0
      %p61 = por %p59, %p60
      %p62 = scmp.ne.s32.totalorder %s51, %s54
      %p63 = scmp.eq.s32.totalorder %s20, 2
      %p64 = por %p62, %p63
      %p65 = scmp.ne.s32.totalorder %s54, %s55
      %p66 = scmp.eq.s32.totalorder %s20, 0
      %p67 = por %p65, %p66
      %p68 = scmp.ne.s32.totalorder %s54, %s55
      %p69 = scmp.eq.s32.totalorder %s21, 2
      %p70 = por %p68, %p69
      %p72 = scmp.ne.s32.totalorder %s55, %s71
      %p73 = scmp.eq.s32.totalorder %s21, 0
      %p74 = por %p72, %p73
      %s75 = ssub.s32 %s15, %s22
      %p76 = scmp.eq.s32.totalorder %s75, 0
      %s78 = sadd.s32 %s77, 1
      %s79 = scalar_select %p76, %s77, %s78
      %p82 = pneg %p76
      %p83 = scmp.eq.s32.totalorder %s15, 2
      %p84 = por %p82, %p83
      %p85 = scmp.ne.s32.totalorder %s77, %s80
      %p86 = scmp.eq.s32.totalorder %s15, 0
      %p87 = por %p85, %p86
      %p88 = scmp.ne.s32.totalorder %s77, %s80
      %p89 = scmp.eq.s32.totalorder %s20, 2
      %p90 = por %p88, %p89
      %p91 = scmp.ne.s32.totalorder %s80, %s81
      %p92 = scmp.eq.s32.totalorder %s20, 0
      %p93 = por %p91, %p92
      %p94 = scmp.ne.s32.totalorder %s80, %s81
      %p95 = scmp.eq.s32.totalorder %s21, 2
      %p96 = por %p94, %p95
      %p98 = scmp.ne.s32.totalorder %s81, %s97
      %p99 = scmp.eq.s32.totalorder %s21, 0
      %p100 = por %p98, %p99
      %s101 = ssub.s32 %s15, %s22
      %p102 = scmp.eq.s32.totalorder %s101, 0
      %s104 = sadd.s32 %s103, 1
      %s105 = scalar_select %p102, %s103, %s104
      %p108 = pneg %p102
      %p109 = scmp.eq.s32.totalorder %s15, 2
      %p110 = por %p108, %p109
      %p111 = scmp.ne.s32.totalorder %s103, %s106
      %p112 = scmp.eq.s32.totalorder %s15, 0
      %p113 = por %p111, %p112
      %p114 = scmp.ne.s32.totalorder %s103, %s106
      %p115 = scmp.eq.s32.totalorder %s20, 2
      %p116 = por %p114, %p115
      %p117 = scmp.ne.s32.totalorder %s106, %s107
      %p118 = scmp.eq.s32.totalorder %s20, 0
      %p119 = por %p117, %p118
      %p120 = scmp.ne.s32.totalorder %s106, %s107
      %p121 = scmp.eq.s32.totalorder %s21, 2
      %p122 = por %p120, %p121
      %p124 = scmp.ne.s32.totalorder %s107, %s123
      %p125 = scmp.eq.s32.totalorder %s21, 0
      %p126 = por %p124, %p125
      %p127 = scmp.le.s32.totalorder 1, %s15
      %p128 = scmp.lt.s32.totalorder %s15, 4
      %p129 = pnand %p127, %p128
      %p130 = pneg %p129
      // Predicated region
      $region9: #{tpu_custom_call.1} parent=5 // pred_check
        _
      $region10: #{tpu_custom_call.1} parent=5 // pred_check_branch
        %132 = sbr.rel (%p129) target = $region12
      $region11: #{tpu_custom_call.1} parent=5 // pred_region
        %s133 = ssub.s32 %s15, 1
      $region12: #{tpu_custom_call.1} parent=5 // pred_fallthru
        _
      %p134 = scmp.lt.s32.totalorder %s15, 3
      // Predicated region
      $region13: #{tpu_custom_call.1} parent=5 // pred_check
        %p135 = pneg %p134
      $region14: #{tpu_custom_call.1} parent=5 // pred_check_branch
        %137 = sbr.rel (%p135) target = $region16
      $region15: #{tpu_custom_call.1} parent=5 // pred_region
        // Predicated region
        $region17: #{tpu_custom_call.1} parent=15 // pred_check
          %p138 = pneg %p35
        $region18: #{tpu_custom_call.1} parent=15 // pred_check_branch
          %140 = sbr.rel (%p138) target = $region20
        $region19: #{tpu_custom_call.1} parent=15 // pred_region
          %s141 = sand.u32 %s25, 1
          %s142 = scalar_lea.sflag [#allocation3], %s141
          %s143 = sand.u32 %s25, 1
          %s144 = smul.addr %s143, 16
          %s145 = scalar_lea.vmem [#allocation2], %s144
          %s147 = ssub.s32 256, 256
          %148 = vsyncadd %s142, %s147
          %s149 = smul.addr %s15, 4
          %s150 = smul.addr %s149, 64
          %s151 = scalar_lea.hbm %s0, %s150
          %s152 = sshll.u32 %s145, 4
          %s153 = int_to_ptr.vmem [resolvable:$true] %s152
          %158 = dma.hbm_to_vmem [thread:$0]  %s151, 256, %s153, %s142, 128, 128, 8
        $region20: #{tpu_custom_call.1} parent=15 // pred_fallthru
          _
        // Predicated region
        $region21: #{tpu_custom_call.1} parent=15 // pred_check
          %p159 = pneg %p61
        $region22: #{tpu_custom_call.1} parent=15 // pred_check_branch
          %161 = sbr.rel (%p159) target = $region24
        $region23: #{tpu_custom_call.1} parent=15 // pred_region
          %p162 = scmp.lt.s32.totalorder %s15, 2
          %s163 = scalar_select %p162, %s15, 2
          %s164 = smul.addr %s163, 4
          %s165 = scalar_lea.vmem %s1, %s164
        $region24: #{tpu_custom_call.1} parent=15 // pred_fallthru
          _
        // Predicated region
        $region25: #{tpu_custom_call.1} parent=15 // pred_check
          %p166 = pneg %p87
        $region26: #{tpu_custom_call.1} parent=15 // pred_check_branch
          %168 = sbr.rel (%p166) target = $region28
        $region27: #{tpu_custom_call.1} parent=15 // pred_region
          %p169 = scmp.lt.s32.totalorder %s15, 2
          %s170 = scalar_select %p169, %s15, 2
          %s171 = smul.addr %s170, 4
          %s172 = scalar_lea.vmem %s2, %s171
        $region28: #{tpu_custom_call.1} parent=15 // pred_fallthru
          _
      $region16: #{tpu_custom_call.1} parent=5 // pred_fallthru
        _
      %p173 = scmp.le.s32.totalorder 1, %s15
      %p174 = scmp.lt.s32.totalorder %s15, 4
      %p175 = pnand %p173, %p174
      %p176 = pneg %p175
      // Predicated region
      $region29: #{tpu_custom_call.1} parent=5 // pred_check
        _
      $region30: #{tpu_custom_call.1} parent=5 // pred_check_branch
        %178 = sbr.rel (%p175) target = $region32
      $region31: #{tpu_custom_call.1} parent=5 // pred_region
        %s179 = ssub.s32 %s15, 1
        %s180 = sand.u32 %s28, 1
        %s181 = scalar_lea.sflag [#allocation3], %s180
        %s182 = sand.u32 %s28, 1
        %s183 = smul.addr %s182, 16
        %s184 = scalar_lea.vmem [#allocation2], %s183
        // Predicated region
        $region33: #{tpu_custom_call.1} parent=31 // pred_check
          %p185 = pneg %p41
        $region34: #{tpu_custom_call.1} parent=31 // pred_check_branch
          %187 = sbr.rel (%p185) target = $region36
        $region35: #{tpu_custom_call.1} parent=31 // pred_region
          %188 = dma.done %s181, 256
        $region36: #{tpu_custom_call.1} parent=31 // pred_fallthru
          _
        %s189 = sand.u32 %s28, 1
        %s190 = scalar_lea.sflag [#allocation3], %s189
        %s191 = sand.u32 %s28, 1
        %s192 = smul.addr %s191, 16
        %s193 = scalar_lea.vmem [#allocation2], %s192
        %p194 = pneg %p41
        %p195 = pneg %p38
        %p196 = scmp.lt.s32.totalorder %s20, 2
        %s197 = scalar_select %p196, %s20, 2
        %s198 = smul.addr %s197, 4
        %s199 = scalar_lea.vmem %s1, %s198
        %p200 = pneg %p67
        %p201 = pneg %p64
        %p202 = scmp.lt.s32.totalorder %s20, 2
        %s203 = scalar_select %p202, %s20, 2
        %s204 = smul.addr %s203, 4
        %s205 = scalar_lea.vmem %s2, %s204
        %p206 = pneg %p93
        %p207 = pneg %p90
        %p208 = pneg %p119
        %p209 = pneg %p116
        %s210 = sand.u32 %s106, 1
        %s211 = scalar_lea.sflag [#allocation4], %s210
        %s212 = sand.u32 %s106, 1
        %s213 = smul.addr %s212, 16
        %s214 = scalar_lea.vmem [#allocation5], %s213
        %p215 = scmp.lt.s32.totalorder %s20, 2
        %s216 = scalar_select %p215, %s20, 2
        %s217 = smul.addr %s216, 4
        %s218 = scalar_lea.vmem %s1, %s217
        %p219 = scmp.lt.s32.totalorder %s20, 2
        %s220 = scalar_select %p219, %s20, 2
        %s221 = smul.addr %s220, 4
        %s222 = scalar_lea.vmem %s2, %s221
        %v223 = vld [vmem:[%s184] sm:$0xff]
        %v224 = vld [vmem:[%s184 + $0x8] sm:$0xff]
        %v227 = vcombine.high %v223, %v223
        %v228 = vcombine.high %v224, %v224
        %vm231 = vcmask 1043456
        %v232 = vsel %vm231, %v223, 0.0
        %v233 = vsel %vm231, %v227, 0.0
        %v234 = vadd.f32 %v232, %v233
        %v235 = vsel %vm231, %v224, 0.0
        %v236 = vadd.f32 %v234, %v235
        %v237 = vsel %vm231, %v228, 0.0
        %v238 = vadd.f32 %v236, %v237
        %239 = vadd.xlane.f32.xlu0 %v238
        %v240 = vpop.xlane.xlu0 %239
        %v241 = vmul.f32 %v223, %v223
        %v242 = vmul.f32 %v224, %v224
        %v245 = vcombine.high %v241, %v241
        %v246 = vcombine.high %v242, %v242
        %v249 = vsel %vm231, %v241, 0.0
        %v250 = vsel %vm231, %v245, 0.0
        %v251 = vadd.f32 %v249, %v250
        %v252 = vsel %vm231, %v242, 0.0
        %v253 = vadd.f32 %v251, %v252
        %v254 = vsel %vm231, %v246, 0.0
        %v255 = vadd.f32 %v253, %v254
        %256 = vadd.xlane.f32.xlu0 %v255
        %v257 = vpop.xlane.xlu0 %256
        %v258 = vmul.f32 %v240, 0.001953125
        %v259 = vmul.f32 %v257, 0.001953125
        %v260 = vmul.f32 %v258, %v258
        %v261 = vsub.f32 %v259, %v260
        %v262 = vmax.f32 %v261, 0.0
        %v263 = vadd.f32 %v262, 1e-05
        %v264 = vrsqrt.pop %v263
        %v265 = vld [vmem:[%s218] sm:$0xf]
        %v266 = vmul.f32 %v265, %v264
        %v267 = vld [vmem:[%s222] sm:$0xf]
        %v268 = vmul.f32 %v258, %v266
        %v269 = vsub.f32 %v267, %v268
        %271 = vset.pattern.permute.xlu0 0
        %272 = vperm.xlu0 %271, %v266
        %v273 = vpop.permute.xlu0 %272
        %v275 = vunpack.c.l.s4 839922192
        %v276 = vunpack.c.0.s8 %v275
        %v277 = vlaneseq
        %v278 = vshrl.u32 %v277, 7
        %v279 = vsub.s32 %v276, %v278
        %v280 = vrot.slane %v273, %v279
        %v282 = vmul.f32 %v223, %v280
        %v283 = vmul.f32 %v224, %v280
        %285 = vset.pattern.permute.xlu0 0
        %286 = vperm.xlu0 %285, %v269
        %v287 = vpop.permute.xlu0 %286
        %v289 = vunpack.c.l.s4 839922192
        %v290 = vunpack.c.0.s8 %v289
        %v291 = vlaneseq
        %v292 = vshrl.u32 %v291, 7
        %v293 = vsub.s32 %v290, %v292
        %v294 = vrot.slane %v287, %v293
        %v296 = vadd.f32 %v282, %v294
        %v297 = vadd.f32 %v283, %v294
        %298 = vst [vmem:[%s214] sm:$0xff] %v296
        %299 = vst [vmem:[%s214 + $0x8] sm:$0xff] %v297
        %s300 = sand.u32 %s106, 1
        %s301 = scalar_lea.sflag [#allocation4], %s300
        %s302 = sand.u32 %s106, 1
        %s303 = smul.addr %s302, 16
        %s304 = scalar_lea.vmem [#allocation5], %s303
        // Predicated region
        $region37: #{tpu_custom_call.1} parent=31 // pred_check
          %p305 = pneg %p116
        $region38: #{tpu_custom_call.1} parent=31 // pred_check_branch
          %307 = sbr.rel (%p305) target = $region40
        $region39: #{tpu_custom_call.1} parent=31 // pred_region
          %s309 = ssub.s32 256, 256
          %310 = vsyncadd %s301, %s309
          %s311 = smul.addr %s20, 4
          %s312 = smul.addr %s311, 64
          %s313 = scalar_lea.hbm %s3, %s312
          %s314 = sshll.u32 %s304, 4
          %s315 = int_to_ptr.vmem [resolvable:$true] %s314
          %320 = dma.vmem_to_hbm [thread:$0]  %s315, 256, %s313, %s301, 128, 128, 8
        $region40: #{tpu_custom_call.1} parent=31 // pred_fallthru
          _
      $region32: #{tpu_custom_call.1} parent=5 // pred_fallthru
        _
      %p321 = scmp.le.s32.totalorder 2, %s15
      // Predicated region
      $region41: #{tpu_custom_call.1} parent=5 // pred_check
        %p322 = pneg %p321
      $region42: #{tpu_custom_call.1} parent=5 // pred_check_branch
        %324 = sbr.rel (%p322) target = $region44
      $region43: #{tpu_custom_call.1} parent=5 // pred_region
        %s325 = ssub.s32 %s15, 2
        // Predicated region
        $region45: #{tpu_custom_call.1} parent=43 // pred_check
          %p326 = pneg %p122
        $region46: #{tpu_custom_call.1} parent=43 // pred_check_branch
          %328 = sbr.rel (%p326) target = $region48
        $region47: #{tpu_custom_call.1} parent=43 // pred_region
          %s329 = sand.u32 %s107, 1
          %s330 = scalar_lea.sflag [#allocation4], %s329
          %s331 = sand.u32 %s107, 1
          %s332 = smul.addr %s331, 16
          %s333 = scalar_lea.vmem [#allocation5], %s332
          %334 = dma.done %s330, 256
        $region48: #{tpu_custom_call.1} parent=43 // pred_fallthru
          _
      $region44: #{tpu_custom_call.1} parent=5 // pred_fallthru
        _
    $region6: #{tpu_custom_call.1} parent=1 // loop_footer
      %s19 = sadd.s32 1, %s15
    $region7: #{tpu_custom_call.1} parent=1 // loop_footer_branch
      %14 = sbr.rel target = $region3
    $region8: #{tpu_custom_call.1} parent=1 // loop_exit
      _
    %335 = vsyncpa [#allocation3], 1
    %s336 = scalar_lea.sflag [#allocation3], 1
    %337 = vsyncpa %s336, 1
    %338 = vsyncpa [#allocation4], 1
    %s339 = scalar_lea.sflag [#allocation4], 1
    %340 = vsyncpa %s339, 1

</llo_original>
